<compile_context>
chip_gen: v7x
topology: tpu7x:2x2x1
jax: 0.10.0
libtpu: 0.0.40
codegen_flags: <defaults>
</compile_context>

<pallas_src>
import numpy as np
import jax
import jax.numpy as jnp
from jax import lax
from jax.experimental import pallas as pl
from jax.experimental.pallas import tpu as pltpu

# ----------------------------- problem sizes ------------------------------
N, F, H, D, L, C, T_DIM, E = 64, 32, 128, 64, 8, 32, 64, 256
DP = 128   # lane-padded width for the attention head dim / output projection

# Use exact reciprocal instead of the EUP approximation when validating against
# a bit-exact reference.
APPROX_RECIP = True

# ---- bf16 weight-slab row offsets (every slice start is a multiple of 16) ----
O_WIN  = 0                      # (F, H)
O_WMSG = O_WIN + F              # (H, H)          32
O_WUPD = O_WMSG + H             # (H, H)         160
O_WQ   = O_WUPD + H             # (H, DP)        288  pre-scaled by D**-0.5, cols D.. zero
O_WO   = O_WQ + H               # (DP, H)        416  rows D.. zero
O_WOUT = O_WO + DP              # (H, DP)        544  cols F.. zero
O_BMSG = O_WOUT + H             # (16, H)        672  row 0 = message bias
O_BUPD = O_BMSG + 16            # (16, H)        688  row 0 = update bias
O_BOUT = O_BUPD + 16            # (16, H)        704  row 0 = output bias
BASE_ROWS = O_BOUT + 16         #                720  trajectory-invariant part
O_K    = BASE_ROWS              # (16, H)        720  rows 0..L-1 = context keys
O_V    = O_K + 16               # (16, H)        736  rows 0..L-1 = context values
SLAB_ROWS = O_V + 16            #                752


# ------------------------------ Pallas kernel ------------------------------
def graphnet_kernel(x_ref, adj_ref, temb_ref, w_ref, out_ref):
    f32, bf16 = jnp.float32, jnp.bfloat16

    def mxu(a, b):
        # bf16 operands, f32 accumulation on the MXU
        return jnp.dot(a.astype(bf16), b.astype(bf16), preferred_element_type=f32)

    def bias(row):
        return w_ref[row:row + 1, :].astype(f32)                   # (1, 128)

    # --- node encoder + additive time conditioning ---
    # (time MLP, its biases and the encoder bias are pre-folded into temb)
    h = mxu(x_ref[...], w_ref[O_WIN:O_WIN + F, :]) + temb_ref[...]            # (N, H)

    # --- message passing: edge scatter-add as dense-adjacency MXU matmul ---
    m = jnp.maximum(mxu(h, w_ref[O_WMSG:O_WMSG + H, :]) + bias(O_BMSG), 0.0)  # (N, H)
    agg = mxu(adj_ref[...], m)                                                # (N, H)
    h = h + jnp.maximum(mxu(agg, w_ref[O_WUPD:O_WUPD + H, :]) + bias(O_BUPD), 0.0)

    # --- cross-attention to the (slab-resident, precomputed) context K/V ---
    q = mxu(h, w_ref[O_WQ:O_WQ + H, :])         # (N, DP); 1/sqrt(D) folded into wq
    k = w_ref[O_K:O_K + L, :]                   # (L, DP) bf16; cols D.. zero
    v = w_ref[O_V:O_V + L, :]                   # (L, DP) bf16; cols D.. zero
    # contract the last dims directly (k is step-invariant, lives in the slab)
    scores = lax.dot_general(q.astype(bf16), k,
                             (((1,), (1,)), ((), ())),
                             preferred_element_type=f32)                      # (N, L)
    scores = scores - jnp.max(scores, axis=-1, keepdims=True)
    p = jnp.exp(scores)
    p = p * pl.reciprocal(jnp.sum(p, axis=-1, keepdims=True), approx=APPROX_RECIP)
    ctx = mxu(p, v)                                                           # (N, DP)
    h = h + mxu(ctx, w_ref[O_WO:O_WO + DP, :])                                # (N, H)

    # --- output projection: lane-dense (N, DP) slab; true eps is cols 0..F ---
    out_ref[...] = (mxu(h, w_ref[O_WOUT:O_WOUT + H, :]) + bias(O_BOUT)).astype(out_ref.dtype)


def run_denoiser(x_bf16, adj_bf16, temb_table, slab):
    """One pallas_call evaluating eps for all S diffusion steps in temb_table.

    x / adj / the weight+KV slab have constant index_maps -> they stay
    VMEM-resident across the whole grid (DMA'd once); only the (1, H) time row
    and the (N, DP) output block move per step.
    """
    S = temb_table.shape[0]
    flops = int(S * 12.3e6)
    transcendentals = int(S * N * L)
    bytes_accessed = int(SLAB_ROWS * H * 2 + N * N * 2 + N * F * 2
                         + S * (H * 4 + N * DP * 4))
    return pl.pallas_call(
        graphnet_kernel,
        out_shape=jax.ShapeDtypeStruct((S, N, DP), jnp.float32),
        grid=(S,),
        in_specs=[
            pl.BlockSpec((N, F), lambda i: (0, 0)),             # x          (resident)
            pl.BlockSpec((N, N), lambda i: (0, 0)),             # adjacency  (resident)
            pl.BlockSpec((None, 1, H), lambda i: (i, 0, 0)),    # temb row   (per step)
            pl.BlockSpec((SLAB_ROWS, H), lambda i: (0, 0)),     # weights+KV (resident)
        ],
        out_specs=pl.BlockSpec((None, N, DP), lambda i: (i, 0, 0)),
        compiler_params=pltpu.CompilerParams(dimension_semantics=("arbitrary",)),
        cost_estimate=pl.CostEstimate(flops=flops,
                                      transcendentals=transcendentals,
                                      bytes_accessed=bytes_accessed),
    )(x_bf16, adj_bf16, temb_table, slab)


# ------------------------------ parameter packing ------------------------------
def _init_params(key):
    names_shapes = [
        ("wt1", (T_DIM, H)), ("wt2", (H, H)), ("win", (F, H)),
        ("wmsg", (H, H)), ("wupd", (H, H)),
        ("wq", (H, D)), ("wk", (C, D)), ("wv", (C, D)), ("wo", (D, H)),
        ("wout", (H, F)),
    ]
    keys = jax.random.split(key, len(names_shapes))
    w = {n: 0.02 * jax.random.normal(k, s, jnp.float32)
         for (n, s), k in zip(names_shapes, keys)}
    # zero-initialised biases (kept for architectural fidelity)
    b = {n: jnp.zeros((H,), jnp.float32)
         for n in ("bt1", "bt2", "bin", "bmsg", "bupd", "bout")}
    return w, b


def _pack_base_slab(w, b):
    """Trajectory-invariant part of the bf16 weight slab (weights + biases)."""
    def pad_cols(a, cols):
        return jnp.zeros((a.shape[0], cols), a.dtype).at[:, :a.shape[1]].set(a)

    def pad_rows(a, rows):
        return jnp.zeros((rows, a.shape[1]), a.dtype).at[:a.shape[0], :].set(a)

    def bias_block(vec):
        return jnp.zeros((16, H), jnp.float32).at[0].set(vec)

    base = jnp.concatenate([
        w["win"],                                # rows   0: 32
        w["wmsg"],                               # rows  32:160
        w["wupd"],                               # rows 160:288
        pad_cols(w["wq"] * (D ** -0.5), DP),     # rows 288:416  (scale folded in)
        pad_rows(w["wo"], DP),                   # rows 416:544
        pad_cols(w["wout"], DP),                 # rows 544:672
        bias_block(b["bmsg"]),                   # rows 672:688
        bias_block(b["bupd"]),                   # rows 688:704
        bias_block(b["bout"]),                   # rows 704:720
    ], axis=0).astype(jnp.bfloat16)
    assert base.shape == (BASE_ROWS, H)
    return base


# ------------------------------ model wrapper ------------------------------
class LatentDiffusionPallas:
    """JAX/Pallas port of LatentDiffusion (DiffusionWrapper around a graph net)."""

    def __init__(self, latent_scaling_factor, n_steps, linear_start, linear_end, key):
        self.latent_scaling_factor = latent_scaling_factor
        self.n_steps = n_steps
        # beta / alpha_bar buffers exactly as in the PyTorch __init__ (fp64 -> fp32)
        beta64 = np.linspace(linear_start ** 0.5, linear_end ** 0.5, n_steps,
                             dtype=np.float64) ** 2
        self.beta = jnp.asarray(beta64, dtype=jnp.float32)
        self.alpha_bar = jnp.asarray(np.cumprod(1.0 - beta64), dtype=jnp.float32)

        self.w, self.b = _init_params(key)
        self.base_slab = _pack_base_slab(self.w, self.b)   # trajectory-invariant
        self._cache = None                                  # (edge_index, cond, adj, slab)

    # --- trajectory-invariant glue: adjacency + context K/V, cached per pair ---
    def _prepare(self, edge_index, cond):
        c = self._cache
        if c is not None and c[0] is edge_index and c[1] is cond:
            return c[2], c[3]
        src = edge_index[0].astype(jnp.int32)
        dst = edge_index[1].astype(jnp.int32)
        adj = jnp.zeros((N, N), jnp.float32).at[dst, src].add(1.0).astype(jnp.bfloat16)
        k = jnp.dot(cond, self.w["wk"])                     # (L, D)
        v = jnp.dot(cond, self.w["wv"])                     # (L, D)
        k_rows = jnp.zeros((16, H), jnp.float32).at[:L, :D].set(k)
        v_rows = jnp.zeros((16, H), jnp.float32).at[:L, :D].set(v)
        slab = jnp.concatenate(
            [self.base_slab, k_rows.astype(jnp.bfloat16), v_rows.astype(jnp.bfloat16)],
            axis=0)
        assert slab.shape == (SLAB_ROWS, H)
        self._cache = (edge_index, cond, adj, slab)
        return adj, slab

    # --- time-embedding MLP hoisted out of the kernel (exact f32) ---
    def _time_embedding(self, t):
        t = jnp.asarray(t).reshape(-1).astype(jnp.float32)          # (S,)
        half = T_DIM // 2
        freqs = jnp.exp(-jnp.log(10000.0) * jnp.arange(half, dtype=jnp.float32) / half)
        args = t[:, None] * freqs[None, :]                           # (S, half)
        tsin = jnp.concatenate([jnp.sin(args), jnp.cos(args)], axis=-1)  # (S, T_DIM)
        t0 = tsin @ self.w["wt1"] + self.b["bt1"]
        temb = jax.nn.silu(t0) @ self.w["wt2"] + self.b["bt2"] + self.b["bin"]
        return temb[:, None, :]                                      # (S, 1, H)

    def forward(self, x, edge_index, t, cond):
        """Single-step eps prediction (module semantics): eps_theta(x_t, t, cond)."""
        adj, slab = self._prepare(edge_index, cond)
        temb = self._time_embedding(jnp.asarray(t).reshape(-1)[:1])  # (1, 1, H)
        out = run_denoiser(x.astype(jnp.bfloat16), adj, temb, slab)  # (1, N, DP)
        return out[0, :, :F]                                         # true eps (N, F)

    def forward_fused(self, x, edge_index, ts, cond):
        """Fused multi-step eps prediction: one pallas_call over grid=(S,) with
        weights / adjacency / K+V resident in VMEM across all steps."""
        adj, slab = self._prepare(edge_index, cond)
        temb = self._time_embedding(ts)                              # (S, 1, H)
        out = run_denoiser(x.astype(jnp.bfloat16), adj, temb, slab)  # (S, N, DP)
        return out[:, :, :F]

    __call__ = forward


# ---------------------------------- main -----------------------------------
if __name__ == "__main__":
    key = jax.random.PRNGKey(0)
    kx, ke, kc, kp = jax.random.split(key, 4)

    x = jax.random.normal(kx, (N, F), jnp.float32)
    edge_index = jax.random.randint(ke, (2, E), 0, N, dtype=jnp.int32)
    t = jnp.array([7], dtype=jnp.int32)
    cond = jax.random.normal(kc, (L, C), jnp.float32)

    model = LatentDiffusionPallas(
        latent_scaling_factor=0.18215,
        n_steps=1000,
        linear_start=1e-4,
        linear_end=2e-2,
        key=kp,
    )

    # single-step forward (module semantics)
    eps = model(x, edge_index, t, cond)
    jax.block_until_ready(eps)
    assert eps.shape == (N, F) and eps.dtype == jnp.float32
    assert bool(jnp.all(jnp.isfinite(eps)))

    # fused multi-step evaluation: one launch, weights resident across the grid
    ts = jnp.array([0, 7, 123, 999], dtype=jnp.int32)
    eps_steps = model.forward_fused(x, edge_index, ts, cond)
    jax.block_until_ready(eps_steps)
    assert eps_steps.shape == (ts.shape[0], N, F)
    assert bool(jnp.all(jnp.isfinite(eps_steps)))
    # step t=7 of the fused call must match the single-step forward
    assert bool(jnp.allclose(eps_steps[1], eps, atol=2e-3, rtol=2e-3))

    print("KERNEL_OK")
</pallas_src>

<mosaic_0001>
module attributes {stable_mosaic.version = 11 : i64} {
  func.func @graphnet_kernel(%arg0: i32, %arg1: memref<64x32xbf16, #tpu.memory_space<vmem>>, %arg2: memref<64x64xbf16, #tpu.memory_space<vmem>>, %arg3: memref<1x1x128xf32, #tpu.memory_space<vmem>>, %arg4: memref<752x128xbf16, #tpu.memory_space<vmem>>, %arg5: memref<1x64x128xf32, #tpu.memory_space<vmem>>) attributes {dimension_semantics = [#tpu.dimension_semantics<arbitrary>], iteration_bounds = array<i64: 1>, scalar_prefetch = 0 : i64, scratch_operands = 0 : i64, tpu.core_type = #tpu.core_type<tc>, window_params = [{pipeline_mode = #tpu.pipeline_mode<synchronous>, transform_indices = @transform_0, window_bounds = array<i64: 64, 32>}, {pipeline_mode = #tpu.pipeline_mode<synchronous>, transform_indices = @transform_1, window_bounds = array<i64: 64, 64>}, {transform_indices = @transform_2, window_bounds = array<i64: 1, 1, 128>}, {pipeline_mode = #tpu.pipeline_mode<synchronous>, transform_indices = @transform_3, window_bounds = array<i64: 752, 128>}, {transform_indices = @transform_4, window_bounds = array<i64: 1, 64, 128>}]} {
    %c0 = arith.constant 0 : index
    %c0_0 = arith.constant 0 : index
    %0 = vector.load %arg1[%c0, %c0_0] : memref<64x32xbf16, #tpu.memory_space<vmem>>, vector<64x32xbf16>
    %c0_1 = arith.constant 0 : index
    %c0_2 = arith.constant 0 : index
    %1 = vector.load %arg4[%c0_1, %c0_2] : memref<752x128xbf16, #tpu.memory_space<vmem>>, vector<32x128xbf16>
    %cst = arith.constant dense<0.000000e+00> : vector<64x128xf32>
    %2 = tpu.matmul %0, %1, %cst {dimension_numbers = #tpu.dot_dimension_numbers<[1], [0], [0], [1], [0, 0, 1, 1], [], []>} : vector<64x32xbf16>, vector<32x128xbf16>, vector<64x128xf32> -> vector<64x128xf32>
    %c0_3 = arith.constant 0 : index
    %c0_4 = arith.constant 0 : index
    %c0_5 = arith.constant 0 : index
    %3 = vector.load %arg3[%c0_3, %c0_4, %c0_5] : memref<1x1x128xf32, #tpu.memory_space<vmem>>, vector<1x1x128xf32>
    %4 = vector.shape_cast %3 : vector<1x1x128xf32> to vector<1x128xf32>
    %5 = vector.broadcast %4 : vector<1x128xf32> to vector<64x128xf32>
    %6 = arith.addf %2, %5 : vector<64x128xf32>
    %c32 = arith.constant 32 : index
    %c0_6 = arith.constant 0 : index
    %7 = vector.load %arg4[%c32, %c0_6] : memref<752x128xbf16, #tpu.memory_space<vmem>>, vector<128x128xbf16>
    %8 = arith.truncf %6 : vector<64x128xf32> to vector<64x128xbf16>
    %cst_7 = arith.constant dense<0.000000e+00> : vector<64x128xf32>
    %9 = tpu.matmul %8, %7, %cst_7 {dimension_numbers = #tpu.dot_dimension_numbers<[1], [0], [0], [1], [0, 0, 1, 1], [], []>} : vector<64x128xbf16>, vector<128x128xbf16>, vector<64x128xf32> -> vector<64x128xf32>
    %c672 = arith.constant 672 : index
    %c0_8 = arith.constant 0 : index
    %10 = vector.load %arg4[%c672, %c0_8] : memref<752x128xbf16, #tpu.memory_space<vmem>>, vector<1x128xbf16>
    %11 = arith.extf %10 : vector<1x128xbf16> to vector<1x128xf32>
    %12 = vector.broadcast %11 : vector<1x128xf32> to vector<64x128xf32>
    %13 = arith.addf %9, %12 : vector<64x128xf32>
    %cst_9 = arith.constant 0.000000e+00 : f32
    %14 = vector.broadcast %cst_9 : f32 to vector<64x128xf32>
    %15 = arith.maximumf %13, %14 : vector<64x128xf32>
    %c0_10 = arith.constant 0 : index
    %c0_11 = arith.constant 0 : index
    %16 = vector.load %arg2[%c0_10, %c0_11] : memref<64x64xbf16, #tpu.memory_space<vmem>>, vector<64x64xbf16>
    %17 = arith.truncf %15 : vector<64x128xf32> to vector<64x128xbf16>
    %cst_12 = arith.constant dense<0.000000e+00> : vector<64x128xf32>
    %18 = tpu.matmul %16, %17, %cst_12 {dimension_numbers = #tpu.dot_dimension_numbers<[1], [0], [0], [1], [0, 0, 1, 1], [], []>} : vector<64x64xbf16>, vector<64x128xbf16>, vector<64x128xf32> -> vector<64x128xf32>
    %c160 = arith.constant 160 : index
    %c0_13 = arith.constant 0 : index
    %19 = vector.load %arg4[%c160, %c0_13] : memref<752x128xbf16, #tpu.memory_space<vmem>>, vector<128x128xbf16>
    %20 = arith.truncf %18 : vector<64x128xf32> to vector<64x128xbf16>
    %cst_14 = arith.constant dense<0.000000e+00> : vector<64x128xf32>
    %21 = tpu.matmul %20, %19, %cst_14 {dimension_numbers = #tpu.dot_dimension_numbers<[1], [0], [0], [1], [0, 0, 1, 1], [], []>} : vector<64x128xbf16>, vector<128x128xbf16>, vector<64x128xf32> -> vector<64x128xf32>
    %c688 = arith.constant 688 : index
    %c0_15 = arith.constant 0 : index
    %22 = vector.load %arg4[%c688, %c0_15] : memref<752x128xbf16, #tpu.memory_space<vmem>>, vector<1x128xbf16>
    %23 = arith.extf %22 : vector<1x128xbf16> to vector<1x128xf32>
    %24 = vector.broadcast %23 : vector<1x128xf32> to vector<64x128xf32>
    %25 = arith.addf %21, %24 : vector<64x128xf32>
    %cst_16 = arith.constant 0.000000e+00 : f32
    %26 = vector.broadcast %cst_16 : f32 to vector<64x128xf32>
    %27 = arith.maximumf %25, %26 : vector<64x128xf32>
    %28 = arith.addf %6, %27 : vector<64x128xf32>
    %c288 = arith.constant 288 : index
    %c0_17 = arith.constant 0 : index
    %29 = vector.load %arg4[%c288, %c0_17] : memref<752x128xbf16, #tpu.memory_space<vmem>>, vector<128x128xbf16>
    %30 = arith.truncf %28 : vector<64x128xf32> to vector<64x128xbf16>
    %cst_18 = arith.constant dense<0.000000e+00> : vector<64x128xf32>
    %31 = tpu.matmul %30, %29, %cst_18 {dimension_numbers = #tpu.dot_dimension_numbers<[1], [0], [0], [1], [0, 0, 1, 1], [], []>} : vector<64x128xbf16>, vector<128x128xbf16>, vector<64x128xf32> -> vector<64x128xf32>
    %c720 = arith.constant 720 : index
    %c0_19 = arith.constant 0 : index
    %32 = vector.load %arg4[%c720, %c0_19] : memref<752x128xbf16, #tpu.memory_space<vmem>>, vector<8x128xbf16>
    %c736 = arith.constant 736 : index
    %c0_20 = arith.constant 0 : index
    %33 = vector.load %arg4[%c736, %c0_20] : memref<752x128xbf16, #tpu.memory_space<vmem>>, vector<8x128xbf16>
    %34 = arith.truncf %31 : vector<64x128xf32> to vector<64x128xbf16>
    %cst_21 = arith.constant dense<0.000000e+00> : vector<64x8xf32>
    %35 = tpu.matmul %34, %32, %cst_21 {dimension_numbers = #tpu.dot_dimension_numbers<[1], [1], [0], [0], [0, 0, 1, 0], [], []>} : vector<64x128xbf16>, vector<8x128xbf16>, vector<64x8xf32> -> vector<64x8xf32>
    %cst_22 = arith.constant dense<0xFF800000> : vector<64xf32>
    %36 = vector.multi_reduction <maximumf>, %35, %cst_22 [1] : vector<64x8xf32> to vector<64xf32>
    %37 = vector.shape_cast %36 : vector<64xf32> to vector<64x1xf32>
    %38 = vector.broadcast %37 : vector<64x1xf32> to vector<64x8xf32>
    %39 = arith.subf %35, %38 : vector<64x8xf32>
    %40 = math.exp %39 : vector<64x8xf32>
    %cst_23 = arith.constant dense<0.000000e+00> : vector<64xf32>
    %41 = vector.multi_reduction <add>, %40, %cst_23 [1] : vector<64x8xf32> to vector<64xf32>
    %42 = vector.shape_cast %41 : vector<64xf32> to vector<64x1xf32>
    %43 = tpu.reciprocal %42 {approx = true} : vector<64x1xf32> -> vector<64x1xf32>
    %44 = vector.broadcast %43 : vector<64x1xf32> to vector<64x8xf32>
    %45 = arith.mulf %40, %44 : vector<64x8xf32>
    %46 = arith.truncf %45 : vector<64x8xf32> to vector<64x8xbf16>
    %cst_24 = arith.constant dense<0.000000e+00> : vector<64x128xf32>
    %47 = tpu.matmul %46, %33, %cst_24 {dimension_numbers = #tpu.dot_dimension_numbers<[1], [0], [0], [1], [0, 0, 1, 1], [], []>} : vector<64x8xbf16>, vector<8x128xbf16>, vector<64x128xf32> -> vector<64x128xf32>
    %c416 = arith.constant 416 : index
    %c0_25 = arith.constant 0 : index
    %48 = vector.load %arg4[%c416, %c0_25] : memref<752x128xbf16, #tpu.memory_space<vmem>>, vector<128x128xbf16>
    %49 = arith.truncf %47 : vector<64x128xf32> to vector<64x128xbf16>
    %cst_26 = arith.constant dense<0.000000e+00> : vector<64x128xf32>
    %50 = tpu.matmul %49, %48, %cst_26 {dimension_numbers = #tpu.dot_dimension_numbers<[1], [0], [0], [1], [0, 0, 1, 1], [], []>} : vector<64x128xbf16>, vector<128x128xbf16>, vector<64x128xf32> -> vector<64x128xf32>
    %51 = arith.addf %28, %50 : vector<64x128xf32>
    %c544 = arith.constant 544 : index
    %c0_27 = arith.constant 0 : index
    %52 = vector.load %arg4[%c544, %c0_27] : memref<752x128xbf16, #tpu.memory_space<vmem>>, vector<128x128xbf16>
    %53 = arith.truncf %51 : vector<64x128xf32> to vector<64x128xbf16>
    %cst_28 = arith.constant dense<0.000000e+00> : vector<64x128xf32>
    %54 = tpu.matmul %53, %52, %cst_28 {dimension_numbers = #tpu.dot_dimension_numbers<[1], [0], [0], [1], [0, 0, 1, 1], [], []>} : vector<64x128xbf16>, vector<128x128xbf16>, vector<64x128xf32> -> vector<64x128xf32>
    %c704 = arith.constant 704 : index
    %c0_29 = arith.constant 0 : index
    %55 = vector.load %arg4[%c704, %c0_29] : memref<752x128xbf16, #tpu.memory_space<vmem>>, vector<1x128xbf16>
    %56 = arith.extf %55 : vector<1x128xbf16> to vector<1x128xf32>
    %57 = vector.broadcast %56 : vector<1x128xf32> to vector<64x128xf32>
    %58 = arith.addf %54, %57 : vector<64x128xf32>
    %c0_30 = arith.constant 0 : index
    %c0_31 = arith.constant 0 : index
    %c0_32 = arith.constant 0 : index
    %59 = vector.load %arg5[%c0_30, %c0_31, %c0_32] : memref<1x64x128xf32, #tpu.memory_space<vmem>>, vector<1x64x128xf32>
    %60 = vector.shape_cast %59 : vector<1x64x128xf32> to vector<64x128xf32>
    %61 = vector.shape_cast %58 : vector<64x128xf32> to vector<1x64x128xf32>
    tpu.vector_store %arg5[%c0_30, %c0_31, %c0_32], %61 {strides = array<i32>} : memref<1x64x128xf32, #tpu.memory_space<vmem>>, vector<1x64x128xf32>,
    return
  }
  func.func @transform_0(%arg0: i32) -> (i32, i32) {
    %c0_i32 = arith.constant 0 : i32
    %c0_i32_0 = arith.constant 0 : i32
    %c0_i32_1 = arith.constant 0 : i32
    return %c0_i32, %c0_i32_0 : i32, i32
  }
  func.func @transform_1(%arg0: i32) -> (i32, i32) {
    %c0_i32 = arith.constant 0 : i32
    %c0_i32_0 = arith.constant 0 : i32
    %c0_i32_1 = arith.constant 0 : i32
    return %c0_i32, %c0_i32_0 : i32, i32
  }
  func.func @transform_2(%arg0: i32) -> (i32, i32, i32) {
    %c0_i32 = arith.constant 0 : i32
    %c0_i32_0 = arith.constant 0 : i32
    %c0_i32_1 = arith.constant 0 : i32
    return %arg0, %c0_i32, %c0_i32_0 : i32, i32, i32
  }
  func.func @transform_3(%arg0: i32) -> (i32, i32) {
    %c0_i32 = arith.constant 0 : i32
    %c0_i32_0 = arith.constant 0 : i32
    %c0_i32_1 = arith.constant 0 : i32
    return %c0_i32, %c0_i32_0 : i32, i32
  }
  func.func @transform_4(%arg0: i32) -> (i32, i32, i32) {
    %c0_i32 = arith.constant 0 : i32
    %c0_i32_0 = arith.constant 0 : i32
    %c0_i32_1 = arith.constant 0 : i32
    return %arg0, %c0_i32, %c0_i32_0 : i32, i32, i32
  }
}

</mosaic_0001>

<llo_original>
// kernel: tpu_custom_call.1
$region0: #{tpu_custom_call.1}
  #allocation0 [shape = 'u32[]', space=smem, size = 0x4, offset = 0x4, fixed_abs, tag = 'smem constant byte address 0x4 - core index']
  #allocation1 [shape = 'u32[144,128]{1,0:T(1,128)}', space=vmem, size = 0x12000, scoped, tag = 'internal scratch']
  %s0 = inlined_call_operand.vmem [shape: bf16[64,32], index: 0, kind: input, shape index: {}]
  %s1 = inlined_call_operand.vmem [shape: bf16[64,64], index: 1, kind: input, shape index: {}]
  %s2 = inlined_call_operand.vmem [shape: f32[1,1,128], index: 2, kind: input, shape index: {}]
  %s3 = inlined_call_operand.hbm [shape: bf16[752,128], index: 3, kind: input, shape index: {}]
  %s4 = inlined_call_operand.hbm [shape: f32[1,64,128], index: 4, kind: output, shape index: {}]
  %s5 = sld [smem:[#allocation0]]
  $region30: #{tpu_custom_call.1} parent=0
    _
  %s7 = ssub.s32 1, %s5
  %s8 = scalar_select 0, %s7, %s5
  $region1: #{tpu_custom_call.1} parent=0
    #allocation2 [shape = 'u8[192512]{0}', space=vmem, size = 0x2f000, scoped, tag = 'input window, operand 3, single buffered']
    #allocation3 [shape = 's32[1]{0}', space=sflag, size = 0x4, scoped, tag = 'scoped memory for tpu_custom_call.1']
    #allocation4 [shape = 's32[1]{0}', space=sflag, size = 0x4, scoped, tag = 'scoped memory for tpu_custom_call.1']
    #allocation5 [shape = 'u8[32768]{0}', space=vmem, size = 0x8000, scoped, tag = 'output window, operand 0, single buffered']
    %9 = vsyncpa [#allocation3], 0
    %10 = vsyncpa [#allocation4], 0
    // Predicated region
    $region2: #{tpu_custom_call.1} parent=1 // pred_check
      _
    $region3: #{tpu_custom_call.1} parent=1 // pred_check_branch
      %12 = sbr.rel (0) target = $region5
    $region4: #{tpu_custom_call.1} parent=1 // pred_region
      _
    $region5: #{tpu_custom_call.1} parent=1 // pred_fallthru
      _
    // Predicated region
    $region6: #{tpu_custom_call.1} parent=1 // pred_check
      _
    $region7: #{tpu_custom_call.1} parent=1 // pred_check_branch
      %14 = sbr.rel (0) target = $region9
    $region8: #{tpu_custom_call.1} parent=1 // pred_region
      _
    $region9: #{tpu_custom_call.1} parent=1 // pred_fallthru
      _
    // Predicated region
    $region10: #{tpu_custom_call.1} parent=1 // pred_check
      _
    $region11: #{tpu_custom_call.1} parent=1 // pred_check_branch
      %16 = sbr.rel (0) target = $region13
    $region12: #{tpu_custom_call.1} parent=1 // pred_region
      _
    $region13: #{tpu_custom_call.1} parent=1 // pred_fallthru
      _
    // Predicated region
    $region14: #{tpu_custom_call.1} parent=1 // pred_check
      _
    $region15: #{tpu_custom_call.1} parent=1 // pred_check_branch
      %18 = sbr.rel (0) target = $region17
    $region16: #{tpu_custom_call.1} parent=1 // pred_region
      %s20 = ssub.s32 6016, 6016
      %21 = vsyncadd [#allocation3], %s20
      %s22 = sshll.u32 [#allocation2], 4
      %s23 = int_to_ptr.vmem [resolvable:$true] %s22
      %28 = dma.hbm_to_vmem [thread:$0]  %s3, 6016, %s23, [#allocation3], 64, 64, 4
    $region17: #{tpu_custom_call.1} parent=1 // pred_fallthru
      _
    // Predicated region
    $region18: #{tpu_custom_call.1} parent=1 // pred_check
      _
    $region19: #{tpu_custom_call.1} parent=1 // pred_check_branch
      %30 = sbr.rel (0) target = $region21
    $region20: #{tpu_custom_call.1} parent=1 // pred_region
      %31 = dma.done [#allocation3], 6016
    $region21: #{tpu_custom_call.1} parent=1 // pred_fallthru
      _
    %v33 = vld [vmem:[%s0] sm:$0xf]
    %v34 = vld [vmem:[%s0 + $0x4] sm:$0xf]
    %v35 = vld [vmem:[%s0 + $0x8] sm:$0xf]
    %v36 = vld [vmem:[%s0 + $0xc] sm:$0xf]
    %v37 = vld [vmem:[%s0 + $0x10] sm:$0xf]
    %v38 = vld [vmem:[%s0 + $0x14] sm:$0xf]
    %v39 = vld [vmem:[%s0 + $0x18] sm:$0xf]
    %v40 = vld [vmem:[%s0 + $0x1c] sm:$0xf]
    %v41 = vld [vmem:[#allocation2] sm:$0xf]
    %v42 = vld [vmem:[#allocation2 + $0x4] sm:$0xf]
    %v43 = vld [vmem:[#allocation2 + $0x8] sm:$0xf]
    %v44 = vld [vmem:[#allocation2 + $0xc] sm:$0xf]
    %v45 = vld [vmem:[%s2] sm:$0x1]
    %v47 = vlaneseq
    %v48 = vshrl.u32 %v47, 7
    %v49 = vsub.s32 0, %v48
    %v50 = vrot.slane %v45, %v49
    %v60 = vunpack.c.l.b16 %v33
    %v61 = vunpack.c.l.b16 %v34
    %v62 = vunpack.c.l.b16 %v35
    %v63 = vunpack.c.l.b16 %v36
    %v64 = vunpack.c.l.b16 %v37
    %v65 = vunpack.c.l.b16 %v38
    %v66 = vunpack.c.l.b16 %v39
    %v67 = vunpack.c.l.b16 %v40
    %v68 = vpack.c.b16 %v61, %v60
    %v69 = vpack.c.b16 %v63, %v62
    %v70 = vpack.c.b16 %v65, %v64
    %v71 = vpack.c.b16 %v67, %v66
    %v76 = vunpack.c.l.b16 %v41
    %v77 = vunpack.c.l.b16 %v42
    %v78 = vunpack.c.l.b16 %v43
    %v79 = vunpack.c.l.b16 %v44
    %v80 = vpack.c.b16 %v77, %v76
    %v81 = vpack.c.b16 %v79, %v78
    %vm84 = vcmask 261120
    %v86 = vsel %vm84, %v68, 0
    %v89 = vsel %vm84, %v69, 0
    %v92 = vsel %vm84, %v70, 0
    %v95 = vsel %vm84, %v71, 0
    %97 = vmatprep.subr.bf16.mxu0 0
    %98 = vmatpush1.bf16.msra.mxu0 %v80
    %99 = vmatprep.subr.bf16.mxu0 0
    %100 = vmatpush1.bf16.msra.mxu0 %v81
    %101 = vmatprep.subr.bf16.mxu0 0
    %102 = vmatpush1.bf16.msra.mxu0 0
    %103 = vmatprep.subr.bf16.mxu0 0
    %104 = vmatpush1.bf16.msra.mxu0 0
    %105 = vmatprep.subr.bf16.mxu0 0
    %106 = vmatpush1.bf16.msra.mxu0 0
    %107 = vmatprep.subr.bf16.mxu0 0
    %108 = vmatpush1.bf16.msra.mxu0 0
    %109 = vmatprep.subr.bf16.mxu0 0
    %110 = vmatpush1.bf16.msra.mxu0 0
    %111 = vmatprep.subr.bf16.mxu0 0
    %112 = vmatpush1.bf16.msra.mxu0 0
    %113 = vmatprep.subr.bf16.mxu0 0
    %114 = vmatpush1.bf16.msra.mxu0 0
    %115 = vmatprep.subr.bf16.mxu0 0
    %116 = vmatpush1.bf16.msra.mxu0 0
    %117 = vmatprep.subr.bf16.mxu0 0
    %118 = vmatpush1.bf16.msra.mxu0 0
    %119 = vmatprep.subr.bf16.mxu0 0
    %120 = vmatpush1.bf16.msra.mxu0 0
    %121 = vmatprep.subr.bf16.mxu0 0
    %122 = vmatpush1.bf16.msra.mxu0 0
    %123 = vmatprep.subr.bf16.mxu0 0
    %124 = vmatpush1.bf16.msra.mxu0 0
    %125 = vmatprep.subr.bf16.mxu0 0
    %126 = vmatpush1.bf16.msra.mxu0 0
    %127 = vmatprep.subr.bf16.mxu0 0
    %128 = vmatpush1.bf16.msra.mxu0 0
    %129 = vmatprep.mubr.bf16.mxu0 0
    %130 = vmatmul.mubr.bf16.gmra.mrb[0].mxu0 %v86
    %v131 = vpop.f32.mrb[0].mxu0
    %v132 = vadd.f32 %v50, %v131
    %v133 = vpop.f32.mrb[0].mxu0
    %v134 = vpop.f32.mrb[0].mxu0
    %v135 = vadd.f32 %v50, %v134
    %v136 = vpop.f32.mrb[0].mxu0
    %137 = vmatprep.mubr.bf16.mxu0 0
    %138 = vmatmul.mubr.bf16.gmra.mrb[0].mxu0 %v89
    %v139 = vpop.f32.mrb[0].mxu0
    %v140 = vadd.f32 %v50, %v139
    %v141 = vpop.f32.mrb[0].mxu0
    %v142 = vpop.f32.mrb[0].mxu0
    %v143 = vadd.f32 %v50, %v142
    %v144 = vpop.f32.mrb[0].mxu0
    %145 = vmatprep.mubr.bf16.mxu0 0
    %146 = vmatmul.mubr.bf16.gmra.mrb[0].mxu0 %v92
    %v147 = vpop.f32.mrb[0].mxu0
    %v148 = vadd.f32 %v50, %v147
    %v149 = vpop.f32.mrb[0].mxu0
    %v150 = vpop.f32.mrb[0].mxu0
    %v151 = vadd.f32 %v50, %v150
    %v152 = vpop.f32.mrb[0].mxu0
    %153 = vmatprep.mubr.bf16.mxu0 0
    %154 = vmatmul.mubr.bf16.gmra.mrb[0].mxu0 %v95
    %v155 = vpop.f32.mrb[0].mxu0
    %v156 = vadd.f32 %v50, %v155
    %v157 = vpop.f32.mrb[0].mxu0
    %v158 = vpop.f32.mrb[0].mxu0
    %v159 = vadd.f32 %v50, %v158
    %v160 = vpop.f32.mrb[0].mxu0
    %161 = vdwg.mxu0
    %v162 = vld [vmem:[#allocation2 + $0x10] sm:$0xf]
    %v163 = vld [vmem:[#allocation2 + $0x14] sm:$0xf]
    %v164 = vld [vmem:[#allocation2 + $0x18] sm:$0xf]
    %v165 = vld [vmem:[#allocation2 + $0x1c] sm:$0xf]
    %v166 = vld [vmem:[#allocation2 + $0x20] sm:$0xf]
    %v167 = vld [vmem:[#allocation2 + $0x24] sm:$0xf]
    %v168 = vld [vmem:[#allocation2 + $0x28] sm:$0xf]
    %v169 = vld [vmem:[#allocation2 + $0x2c] sm:$0xf]
    %v170 = vld [vmem:[#allocation2 + $0x30] sm:$0xf]
    %v171 = vld [vmem:[#allocation2 + $0x34] sm:$0xf]
    %v172 = vld [vmem:[#allocation2 + $0x38] sm:$0xf]
    %v173 = vld [vmem:[#allocation2 + $0x3c] sm:$0xf]
    %v174 = vld [vmem:[#allocation2 + $0x40] sm:$0xf]
    %v175 = vld [vmem:[#allocation2 + $0x44] sm:$0xf]
    %v176 = vld [vmem:[#allocation2 + $0x48] sm:$0xf]
    %v177 = vld [vmem:[#allocation2 + $0x4c] sm:$0xf]
    %v178 = vpack.c.bf16 %v135, %v132
    %v179 = vpack.c.bf16 %v143, %v140
    %v180 = vpack.c.bf16 %v151, %v148
    %v181 = vpack.c.bf16 %v159, %v156
    %v182 = vld [vmem:[#allocation2 + $0x150] sm:$0x1]
    %v183 = vunpack.c.l.bf16 %v182
    %v184 = vlaneseq
    %v185 = vshrl.u32 %v184, 7
    %v186 = vsub.s32 0, %v185
    %v187 = vrot.slane %v183, %v186
    %v204 = vunpack.c.l.b16 %v162
    %v205 = vunpack.c.l.b16 %v163
    %v206 = vunpack.c.l.b16 %v164
    %v207 = vunpack.c.l.b16 %v165
    %v208 = vunpack.c.l.b16 %v166
    %v209 = vunpack.c.l.b16 %v167
    %v210 = vunpack.c.l.b16 %v168
    %v211 = vunpack.c.l.b16 %v169
    %v212 = vunpack.c.l.b16 %v170
    %v213 = vunpack.c.l.b16 %v171
    %v214 = vunpack.c.l.b16 %v172
    %v215 = vunpack.c.l.b16 %v173
    %v216 = vunpack.c.l.b16 %v174
    %v217 = vunpack.c.l.b16 %v175
    %v218 = vunpack.c.l.b16 %v176
    %v219 = vunpack.c.l.b16 %v177
    %v220 = vpack.c.b16 %v205, %v204
    %v221 = vpack.c.b16 %v207, %v206
    %v222 = vpack.c.b16 %v209, %v208
    %v223 = vpack.c.b16 %v211, %v210
    %v224 = vpack.c.b16 %v213, %v212
    %v225 = vpack.c.b16 %v215, %v214
    %v226 = vpack.c.b16 %v217, %v216
    %v227 = vpack.c.b16 %v219, %v218
    %236 = vmatprep.subr.bf16.mxu0 0
    %237 = vmatpush1.bf16.msra.mxu0 %v220
    %238 = vmatprep.subr.bf16.mxu0 0
    %239 = vmatpush1.bf16.msra.mxu0 %v221
    %240 = vmatprep.subr.bf16.mxu0 0
    %241 = vmatpush1.bf16.msra.mxu0 %v222
    %242 = vmatprep.subr.bf16.mxu0 0
    %243 = vmatpush1.bf16.msra.mxu0 %v223
    %244 = vmatprep.subr.bf16.mxu0 0
    %245 = vmatpush1.bf16.msra.mxu0 %v224
    %246 = vmatprep.subr.bf16.mxu0 0
    %247 = vmatpush1.bf16.msra.mxu0 %v225
    %248 = vmatprep.subr.bf16.mxu0 0
    %249 = vmatpush1.bf16.msra.mxu0 %v226
    %250 = vmatprep.subr.bf16.mxu0 0
    %251 = vmatpush1.bf16.msra.mxu0 %v227
    %252 = vmatprep.subr.bf16.mxu0 0
    %253 = vmatpush1.bf16.msra.mxu0 0
    %254 = vmatprep.subr.bf16.mxu0 0
    %255 = vmatpush1.bf16.msra.mxu0 0
    %256 = vmatprep.subr.bf16.mxu0 0
    %257 = vmatpush1.bf16.msra.mxu0 0
    %258 = vmatprep.subr.bf16.mxu0 0
    %259 = vmatpush1.bf16.msra.mxu0 0
    %260 = vmatprep.subr.bf16.mxu0 0
    %261 = vmatpush1.bf16.msra.mxu0 0
    %262 = vmatprep.subr.bf16.mxu0 0
    %263 = vmatpush1.bf16.msra.mxu0 0
    %264 = vmatprep.subr.bf16.mxu0 0
    %265 = vmatpush1.bf16.msra.mxu0 0
    %266 = vmatprep.subr.bf16.mxu0 0
    %267 = vmatpush1.bf16.msra.mxu0 0
    %268 = vmatprep.mubr.bf16.mxu0 0
    %269 = vmatmul.mubr.bf16.gmra.mrb[0].mxu0 %v178
    %v270 = vpop.f32.mrb[0].mxu0
    %v271 = vadd.f32 %v187, %v270
    %v272 = vpop.f32.mrb[0].mxu0
    %v273 = vpop.f32.mrb[0].mxu0
    %v274 = vadd.f32 %v187, %v273
    %v275 = vpop.f32.mrb[0].mxu0
    %276 = vmatprep.mubr.bf16.mxu0 0
    %277 = vmatmul.mubr.bf16.gmra.mrb[0].mxu0 %v179
    %v278 = vpop.f32.mrb[0].mxu0
    %v279 = vadd.f32 %v187, %v278
    %v280 = vpop.f32.mrb[0].mxu0
    %v281 = vpop.f32.mrb[0].mxu0
    %v282 = vadd.f32 %v187, %v281
    %v283 = vpop.f32.mrb[0].mxu0
    %284 = vmatprep.mubr.bf16.mxu0 0
    %285 = vmatmul.mubr.bf16.gmra.mrb[0].mxu0 %v180
    %v286 = vpop.f32.mrb[0].mxu0
    %v287 = vadd.f32 %v187, %v286
    %v288 = vpop.f32.mrb[0].mxu0
    %v289 = vpop.f32.mrb[0].mxu0
    %v290 = vadd.f32 %v187, %v289
    %v291 = vpop.f32.mrb[0].mxu0
    %292 = vmatprep.mubr.bf16.mxu0 0
    %293 = vmatmul.mubr.bf16.gmra.mrb[0].mxu0 %v181
    %v294 = vpop.f32.mrb[0].mxu0
    %v295 = vadd.f32 %v187, %v294
    %v296 = vpop.f32.mrb[0].mxu0
    %v297 = vpop.f32.mrb[0].mxu0
    %v298 = vadd.f32 %v187, %v297
    %v299 = vpop.f32.mrb[0].mxu0
    %300 = vdwg.mxu0
    %v301 = vmax.f32 %v271, 0.0
    %v302 = vmax.f32 %v274, 0.0
    %v303 = vmax.f32 %v279, 0.0
    %v304 = vmax.f32 %v282, 0.0
    %v305 = vmax.f32 %v287, 0.0
    %v306 = vmax.f32 %v290, 0.0
    %v307 = vmax.f32 %v295, 0.0
    %v308 = vmax.f32 %v298, 0.0
    %v309 = vld [vmem:[%s1] sm:$0xf]
    %v310 = vld [vmem:[%s1 + $0x4] sm:$0xf]
    %v311 = vld [vmem:[%s1 + $0x8] sm:$0xf]
    %v312 = vld [vmem:[%s1 + $0xc] sm:$0xf]
    %v313 = vld [vmem:[%s1 + $0x10] sm:$0xf]
    %v314 = vld [vmem:[%s1 + $0x14] sm:$0xf]
    %v315 = vld [vmem:[%s1 + $0x18] sm:$0xf]
    %v316 = vld [vmem:[%s1 + $0x1c] sm:$0xf]
    %v317 = vpack.c.bf16 %v302, %v301
    %v318 = vpack.c.bf16 %v304, %v303
    %v319 = vpack.c.bf16 %v306, %v305
    %v320 = vpack.c.bf16 %v308, %v307
    %v329 = vunpack.c.l.b16 %v309
    %v330 = vunpack.c.l.b16 %v310
    %v331 = vunpack.c.l.b16 %v311
    %v332 = vunpack.c.l.b16 %v312
    %v333 = vunpack.c.l.b16 %v313
    %v334 = vunpack.c.l.b16 %v314
    %v335 = vunpack.c.l.b16 %v315
    %v336 = vunpack.c.l.b16 %v316
    %v337 = vpack.c.b16 %v330, %v329
    %v338 = vpack.c.b16 %v332, %v331
    %v339 = vpack.c.b16 %v334, %v333
    %v340 = vpack.c.b16 %v336, %v335
    %vm341 = vcmask 523264
    %v343 = vsel %vm341, %v337, 0
    %v346 = vsel %vm341, %v338, 0
    %v349 = vsel %vm341, %v339, 0
    %v352 = vsel %vm341, %v340, 0
    %354 = vmatprep.subr.bf16.mxu0 0
    %355 = vmatpush1.bf16.msra.mxu0 %v317
    %356 = vmatprep.subr.bf16.mxu0 0
    %357 = vmatpush1.bf16.msra.mxu0 %v318
    %358 = vmatprep.subr.bf16.mxu0 0
    %359 = vmatpush1.bf16.msra.mxu0 %v319
    %360 = vmatprep.subr.bf16.mxu0 0
    %361 = vmatpush1.bf16.msra.mxu0 %v320
    %362 = vmatprep.subr.bf16.mxu0 0
    %363 = vmatpush1.bf16.msra.mxu0 0
    %364 = vmatprep.subr.bf16.mxu0 0
    %365 = vmatpush1.bf16.msra.mxu0 0
    %366 = vmatprep.subr.bf16.mxu0 0
    %367 = vmatpush1.bf16.msra.mxu0 0
    %368 = vmatprep.subr.bf16.mxu0 0
    %369 = vmatpush1.bf16.msra.mxu0 0
    %370 = vmatprep.subr.bf16.mxu0 0
    %371 = vmatpush1.bf16.msra.mxu0 0
    %372 = vmatprep.subr.bf16.mxu0 0
    %373 = vmatpush1.bf16.msra.mxu0 0
    %374 = vmatprep.subr.bf16.mxu0 0
    %375 = vmatpush1.bf16.msra.mxu0 0
    %376 = vmatprep.subr.bf16.mxu0 0
    %377 = vmatpush1.bf16.msra.mxu0 0
    %378 = vmatprep.subr.bf16.mxu0 0
    %379 = vmatpush1.bf16.msra.mxu0 0
    %380 = vmatprep.subr.bf16.mxu0 0
    %381 = vmatpush1.bf16.msra.mxu0 0
    %382 = vmatprep.subr.bf16.mxu0 0
    %383 = vmatpush1.bf16.msra.mxu0 0
    %384 = vmatprep.subr.bf16.mxu0 0
    %385 = vmatpush1.bf16.msra.mxu0 0
    %386 = vmatprep.mubr.bf16.mxu0 0
    %387 = vmatmul.mubr.bf16.gmra.mrb[0].mxu0 %v343
    %v388 = vpop.f32.mrb[0].mxu0
    %v389 = vadd.f32 0.0, %v388
    %v390 = vpop.f32.mrb[0].mxu0
    %v391 = vpop.f32.mrb[0].mxu0
    %v392 = vadd.f32 0.0, %v391
    %v393 = vpop.f32.mrb[0].mxu0
    %394 = vmatprep.mubr.bf16.mxu0 0
    %395 = vmatmul.mubr.bf16.gmra.mrb[0].mxu0 %v346
    %v396 = vpop.f32.mrb[0].mxu0
    %v397 = vadd.f32 0.0, %v396
    %v398 = vpop.f32.mrb[0].mxu0
    %v399 = vpop.f32.mrb[0].mxu0
    %v400 = vadd.f32 0.0, %v399
    %v401 = vpop.f32.mrb[0].mxu0
    %402 = vmatprep.mubr.bf16.mxu0 0
    %403 = vmatmul.mubr.bf16.gmra.mrb[0].mxu0 %v349
    %v404 = vpop.f32.mrb[0].mxu0
    %v405 = vadd.f32 0.0, %v404
    %v406 = vpop.f32.mrb[0].mxu0
    %v407 = vpop.f32.mrb[0].mxu0
    %v408 = vadd.f32 0.0, %v407
    %v409 = vpop.f32.mrb[0].mxu0
    %410 = vmatprep.mubr.bf16.mxu0 0
    %411 = vmatmul.mubr.bf16.gmra.mrb[0].mxu0 %v352
    %v412 = vpop.f32.mrb[0].mxu0
    %v413 = vadd.f32 0.0, %v412
    %v414 = vpop.f32.mrb[0].mxu0
    %v415 = vpop.f32.mrb[0].mxu0
    %v416 = vadd.f32 0.0, %v415
    %v417 = vpop.f32.mrb[0].mxu0
    %418 = vdwg.mxu0
    %v419 = vld [vmem:[#allocation2 + $0x50] sm:$0xf]
    %v420 = vld [vmem:[#allocation2 + $0x54] sm:$0xf]
    %v421 = vld [vmem:[#allocation2 + $0x58] sm:$0xf]
    %v422 = vld [vmem:[#allocation2 + $0x5c] sm:$0xf]
    %v423 = vld [vmem:[#allocation2 + $0x60] sm:$0xf]
    %v424 = vld [vmem:[#allocation2 + $0x64] sm:$0xf]
    %v425 = vld [vmem:[#allocation2 + $0x68] sm:$0xf]
    %v426 = vld [vmem:[#allocation2 + $0x6c] sm:$0xf]
    %v427 = vld [vmem:[#allocation2 + $0x70] sm:$0xf]
    %v428 = vld [vmem:[#allocation2 + $0x74] sm:$0xf]
    %v429 = vld [vmem:[#allocation2 + $0x78] sm:$0xf]
    %v430 = vld [vmem:[#allocation2 + $0x7c] sm:$0xf]
    %v431 = vld [vmem:[#allocation2 + $0x80] sm:$0xf]
    %v432 = vld [vmem:[#allocation2 + $0x84] sm:$0xf]
    %v433 = vld [vmem:[#allocation2 + $0x88] sm:$0xf]
    %v434 = vld [vmem:[#allocation2 + $0x8c] sm:$0xf]
    %v435 = vpack.c.bf16 %v392, %v389
    %v436 = vpack.c.bf16 %v400, %v397
    %v437 = vpack.c.bf16 %v408, %v405
    %v438 = vpack.c.bf16 %v416, %v413
    %v439 = vld [vmem:[#allocation2 + $0x158] sm:$0x1]
    %v440 = vunpack.c.l.bf16 %v439
    %v441 = vlaneseq
    %v442 = vshrl.u32 %v441, 7
    %v443 = vsub.s32 0, %v442
    %v444 = vrot.slane %v440, %v443
    %v461 = vunpack.c.l.b16 %v419
    %v462 = vunpack.c.l.b16 %v420
    %v463 = vunpack.c.l.b16 %v421
    %v464 = vunpack.c.l.b16 %v422
    %v465 = vunpack.c.l.b16 %v423
    %v466 = vunpack.c.l.b16 %v424
    %v467 = vunpack.c.l.b16 %v425
    %v468 = vunpack.c.l.b16 %v426
    %v469 = vunpack.c.l.b16 %v427
    %v470 = vunpack.c.l.b16 %v428
    %v471 = vunpack.c.l.b16 %v429
    %v472 = vunpack.c.l.b16 %v430
    %v473 = vunpack.c.l.b16 %v431
    %v474 = vunpack.c.l.b16 %v432
    %v475 = vunpack.c.l.b16 %v433
    %v476 = vunpack.c.l.b16 %v434
    %v477 = vpack.c.b16 %v462, %v461
    %v478 = vpack.c.b16 %v464, %v463
    %v479 = vpack.c.b16 %v466, %v465
    %v480 = vpack.c.b16 %v468, %v467
    %v481 = vpack.c.b16 %v470, %v469
    %v482 = vpack.c.b16 %v472, %v471
    %v483 = vpack.c.b16 %v474, %v473
    %v484 = vpack.c.b16 %v476, %v475
    %493 = vmatprep.subr.bf16.mxu0 0
    %494 = vmatpush1.bf16.msra.mxu0 %v477
    %495 = vmatprep.subr.bf16.mxu0 0
    %496 = vmatpush1.bf16.msra.mxu0 %v478
    %497 = vmatprep.subr.bf16.mxu0 0
    %498 = vmatpush1.bf16.msra.mxu0 %v479
    %499 = vmatprep.subr.bf16.mxu0 0
    %500 = vmatpush1.bf16.msra.mxu0 %v480
    %501 = vmatprep.subr.bf16.mxu0 0
    %502 = vmatpush1.bf16.msra.mxu0 %v481
    %503 = vmatprep.subr.bf16.mxu0 0
    %504 = vmatpush1.bf16.msra.mxu0 %v482
    %505 = vmatprep.subr.bf16.mxu0 0
    %506 = vmatpush1.bf16.msra.mxu0 %v483
    %507 = vmatprep.subr.bf16.mxu0 0
    %508 = vmatpush1.bf16.msra.mxu0 %v484
    %509 = vmatprep.subr.bf16.mxu0 0
    %510 = vmatpush1.bf16.msra.mxu0 0
    %511 = vmatprep.subr.bf16.mxu0 0
    %512 = vmatpush1.bf16.msra.mxu0 0
    %513 = vmatprep.subr.bf16.mxu0 0
    %514 = vmatpush1.bf16.msra.mxu0 0
    %515 = vmatprep.subr.bf16.mxu0 0
    %516 = vmatpush1.bf16.msra.mxu0 0
    %517 = vmatprep.subr.bf16.mxu0 0
    %518 = vmatpush1.bf16.msra.mxu0 0
    %519 = vmatprep.subr.bf16.mxu0 0
    %520 = vmatpush1.bf16.msra.mxu0 0
    %521 = vmatprep.subr.bf16.mxu0 0
    %522 = vmatpush1.bf16.msra.mxu0 0
    %523 = vmatprep.subr.bf16.mxu0 0
    %524 = vmatpush1.bf16.msra.mxu0 0
    %525 = vmatprep.mubr.bf16.mxu0 0
    %526 = vmatmul.mubr.bf16.gmra.mrb[0].mxu0 %v435
    %v527 = vpop.f32.mrb[0].mxu0
    %v528 = vadd.f32 %v444, %v527
    %v529 = vpop.f32.mrb[0].mxu0
    %v530 = vpop.f32.mrb[0].mxu0
    %v531 = vadd.f32 %v444, %v530
    %v532 = vpop.f32.mrb[0].mxu0
    %533 = vmatprep.mubr.bf16.mxu0 0
    %534 = vmatmul.mubr.bf16.gmra.mrb[0].mxu0 %v436
    %v535 = vpop.f32.mrb[0].mxu0
    %v536 = vadd.f32 %v444, %v535
    %v537 = vpop.f32.mrb[0].mxu0
    %v538 = vpop.f32.mrb[0].mxu0
    %v539 = vadd.f32 %v444, %v538
    %v540 = vpop.f32.mrb[0].mxu0
    %541 = vmatprep.mubr.bf16.mxu0 0
    %542 = vmatmul.mubr.bf16.gmra.mrb[0].mxu0 %v437
    %v543 = vpop.f32.mrb[0].mxu0
    %v544 = vadd.f32 %v444, %v543
    %v545 = vpop.f32.mrb[0].mxu0
    %v546 = vpop.f32.mrb[0].mxu0
    %v547 = vadd.f32 %v444, %v546
    %v548 = vpop.f32.mrb[0].mxu0
    %549 = vmatprep.mubr.bf16.mxu0 0
    %550 = vmatmul.mubr.bf16.gmra.mrb[0].mxu0 %v438
    %v551 = vpop.f32.mrb[0].mxu0
    %v552 = vadd.f32 %v444, %v551
    %v553 = vpop.f32.mrb[0].mxu0
    %v554 = vpop.f32.mrb[0].mxu0
    %v555 = vadd.f32 %v444, %v554
    %v556 = vpop.f32.mrb[0].mxu0
    %557 = vdwg.mxu0
    %v558 = vmax.f32 %v528, 0.0
    %v559 = vmax.f32 %v531, 0.0
    %v560 = vmax.f32 %v536, 0.0
    %v561 = vmax.f32 %v539, 0.0
    %v562 = vmax.f32 %v544, 0.0
    %v563 = vmax.f32 %v547, 0.0
    %v564 = vmax.f32 %v552, 0.0
    %v565 = vmax.f32 %v555, 0.0
    %v566 = vadd.f32 %v132, %v558
    %v567 = vadd.f32 %v135, %v559
    %v568 = vadd.f32 %v140, %v560
    %v569 = vadd.f32 %v143, %v561
    %v570 = vadd.f32 %v148, %v562
    %v571 = vadd.f32 %v151, %v563
    %v572 = vadd.f32 %v156, %v564
    %v573 = vadd.f32 %v159, %v565
    %v574 = vld [vmem:[#allocation2 + $0x90] sm:$0xf]
    %v575 = vld [vmem:[#allocation2 + $0x94] sm:$0xf]
    %v576 = vld [vmem:[#allocation2 + $0x98] sm:$0xf]
    %v577 = vld [vmem:[#allocation2 + $0x9c] sm:$0xf]
    %v578 = vld [vmem:[#allocation2 + $0xa0] sm:$0xf]
    %v579 = vld [vmem:[#allocation2 + $0xa4] sm:$0xf]
    %v580 = vld [vmem:[#allocation2 + $0xa8] sm:$0xf]
    %v581 = vld [vmem:[#allocation2 + $0xac] sm:$0xf]
    %v582 = vld [vmem:[#allocation2 + $0xb0] sm:$0xf]
    %v583 = vld [vmem:[#allocation2 + $0xb4] sm:$0xf]
    %v584 = vld [vmem:[#allocation2 + $0xb8] sm:$0xf]
    %v585 = vld [vmem:[#allocation2 + $0xbc] sm:$0xf]
    %v586 = vld [vmem:[#allocation2 + $0xc0] sm:$0xf]
    %v587 = vld [vmem:[#allocation2 + $0xc4] sm:$0xf]
    %v588 = vld [vmem:[#allocation2 + $0xc8] sm:$0xf]
    %v589 = vld [vmem:[#allocation2 + $0xcc] sm:$0xf]
    %v590 = vpack.c.bf16 %v567, %v566
    %v591 = vpack.c.bf16 %v569, %v568
    %v592 = vpack.c.bf16 %v571, %v570
    %v593 = vpack.c.bf16 %v573, %v572
    %v610 = vunpack.c.l.b16 %v574
    %v611 = vunpack.c.l.b16 %v575
    %v612 = vunpack.c.l.b16 %v576
    %v613 = vunpack.c.l.b16 %v577
    %v614 = vunpack.c.l.b16 %v578
    %v615 = vunpack.c.l.b16 %v579
    %v616 = vunpack.c.l.b16 %v580
    %v617 = vunpack.c.l.b16 %v581
    %v618 = vunpack.c.l.b16 %v582
    %v619 = vunpack.c.l.b16 %v583
    %v620 = vunpack.c.l.b16 %v584
    %v621 = vunpack.c.l.b16 %v585
    %v622 = vunpack.c.l.b16 %v586
    %v623 = vunpack.c.l.b16 %v587
    %v624 = vunpack.c.l.b16 %v588
    %v625 = vunpack.c.l.b16 %v589
    %v626 = vpack.c.b16 %v611, %v610
    %v627 = vpack.c.b16 %v613, %v612
    %v628 = vpack.c.b16 %v615, %v614
    %v629 = vpack.c.b16 %v617, %v616
    %v630 = vpack.c.b16 %v619, %v618
    %v631 = vpack.c.b16 %v621, %v620
    %v632 = vpack.c.b16 %v623, %v622
    %v633 = vpack.c.b16 %v625, %v624
    %642 = vmatprep.subr.bf16.mxu0 0
    %643 = vmatpush1.bf16.msra.mxu0 %v626
    %644 = vmatprep.subr.bf16.mxu0 0
    %645 = vmatpush1.bf16.msra.mxu0 %v627
    %646 = vmatprep.subr.bf16.mxu0 0
    %647 = vmatpush1.bf16.msra.mxu0 %v628
    %648 = vmatprep.subr.bf16.mxu0 0
    %649 = vmatpush1.bf16.msra.mxu0 %v629
    %650 = vmatprep.subr.bf16.mxu0 0
    %651 = vmatpush1.bf16.msra.mxu0 %v630
    %652 = vmatprep.subr.bf16.mxu0 0
    %653 = vmatpush1.bf16.msra.mxu0 %v631
    %654 = vmatprep.subr.bf16.mxu0 0
    %655 = vmatpush1.bf16.msra.mxu0 %v632
    %656 = vmatprep.subr.bf16.mxu0 0
    %657 = vmatpush1.bf16.msra.mxu0 %v633
    %658 = vmatprep.subr.bf16.mxu0 0
    %659 = vmatpush1.bf16.msra.mxu0 0
    %660 = vmatprep.subr.bf16.mxu0 0
    %661 = vmatpush1.bf16.msra.mxu0 0
    %662 = vmatprep.subr.bf16.mxu0 0
    %663 = vmatpush1.bf16.msra.mxu0 0
    %664 = vmatprep.subr.bf16.mxu0 0
    %665 = vmatpush1.bf16.msra.mxu0 0
    %666 = vmatprep.subr.bf16.mxu0 0
    %667 = vmatpush1.bf16.msra.mxu0 0
    %668 = vmatprep.subr.bf16.mxu0 0
    %669 = vmatpush1.bf16.msra.mxu0 0
    %670 = vmatprep.subr.bf16.mxu0 0
    %671 = vmatpush1.bf16.msra.mxu0 0
    %672 = vmatprep.subr.bf16.mxu0 0
    %673 = vmatpush1.bf16.msra.mxu0 0
    %674 = vmatprep.mubr.bf16.mxu0 0
    %675 = vmatmul.mubr.bf16.gmra.mrb[0].mxu0 %v590
    %v676 = vpop.f32.mrb[0].mxu0
    %v677 = vadd.f32 0.0, %v676
    %v678 = vpop.f32.mrb[0].mxu0
    %v679 = vpop.f32.mrb[0].mxu0
    %v680 = vadd.f32 0.0, %v679
    %v681 = vpop.f32.mrb[0].mxu0
    %682 = vmatprep.mubr.bf16.mxu0 0
    %683 = vmatmul.mubr.bf16.gmra.mrb[0].mxu0 %v591
    %v684 = vpop.f32.mrb[0].mxu0
    %v685 = vadd.f32 0.0, %v684
    %v686 = vpop.f32.mrb[0].mxu0
    %v687 = vpop.f32.mrb[0].mxu0
    %v688 = vadd.f32 0.0, %v687
    %v689 = vpop.f32.mrb[0].mxu0
    %690 = vmatprep.mubr.bf16.mxu0 0
    %691 = vmatmul.mubr.bf16.gmra.mrb[0].mxu0 %v592
    %v692 = vpop.f32.mrb[0].mxu0
    %v693 = vadd.f32 0.0, %v692
    %v694 = vpop.f32.mrb[0].mxu0
    %v695 = vpop.f32.mrb[0].mxu0
    %v696 = vadd.f32 0.0, %v695
    %v697 = vpop.f32.mrb[0].mxu0
    %698 = vmatprep.mubr.bf16.mxu0 0
    %699 = vmatmul.mubr.bf16.gmra.mrb[0].mxu0 %v593
    %v700 = vpop.f32.mrb[0].mxu0
    %v701 = vadd.f32 0.0, %v700
    %v702 = vpop.f32.mrb[0].mxu0
    %v703 = vpop.f32.mrb[0].mxu0
    %v704 = vadd.f32 0.0, %v703
    %v705 = vpop.f32.mrb[0].mxu0
    %706 = vdwg.mxu0
    %v707 = vld [vmem:[#allocation2 + $0x168] sm:$0xf]
    %v708 = vld [vmem:[#allocation2 + $0x170] sm:$0xf]
    %v709 = vpack.c.bf16 %v680, %v677
    %v710 = vpack.c.bf16 %v688, %v685
    %v711 = vpack.c.bf16 %v696, %v693
    %v712 = vpack.c.bf16 %v704, %v701
    %713 = vmatprep.subr.bf16.mxu0 0
    %714 = vmatpush1.bf16.xpose.msra.mxu0 %v707
    %715 = vmatprep.subr.bf16.mxu0 0
    %716 = vmatpush1.bf16.xpose.msra.mxu0 0
    %717 = vmatprep.subr.bf16.mxu0 0
    %718 = vmatpush1.bf16.xpose.msra.mxu0 0
    %719 = vmatprep.subr.bf16.mxu0 0
    %720 = vmatpush1.bf16.xpose.msra.mxu0 0
    %721 = vmatprep.subr.bf16.mxu0 0
    %722 = vmatpush1.bf16.xpose.msra.mxu0 0
    %723 = vmatprep.subr.bf16.mxu0 0
    %724 = vmatpush1.bf16.xpose.msra.mxu0 0
    %725 = vmatprep.subr.bf16.mxu0 0
    %726 = vmatpush1.bf16.xpose.msra.mxu0 0
    %727 = vmatprep.subr.bf16.mxu0 0
    %728 = vmatpush1.bf16.xpose.msra.mxu0 0
    %729 = vmatprep.subr.bf16.mxu0 0
    %730 = vmatpush1.bf16.xpose.msra.mxu0 0
    %731 = vmatprep.subr.bf16.mxu0 0
    %732 = vmatpush1.bf16.xpose.msra.mxu0 0
    %733 = vmatprep.subr.bf16.mxu0 0
    %734 = vmatpush1.bf16.xpose.msra.mxu0 0
    %735 = vmatprep.subr.bf16.mxu0 0
    %736 = vmatpush1.bf16.xpose.msra.mxu0 0
    %737 = vmatprep.subr.bf16.mxu0 0
    %738 = vmatpush1.bf16.xpose.msra.mxu0 0
    %739 = vmatprep.subr.bf16.mxu0 0
    %740 = vmatpush1.bf16.xpose.msra.mxu0 0
    %741 = vmatprep.subr.bf16.mxu0 0
    %742 = vmatpush1.bf16.xpose.msra.mxu0 0
    %743 = vmatprep.subr.bf16.mxu0 0
    %744 = vmatpush1.bf16.xpose.msra.mxu0 0
    %745 = vmatprep.mubr.bf16.mxu0 0
    %746 = vmatmul.mubr.bf16.gmra.mrb[0].mxu0 %v709
    %v747 = vpop.f32.mrb[0].mxu0
    %v748 = vadd.f32 0.0, %v747
    %v749 = vpop.f32.mrb[0].mxu0
    %v750 = vpop.f32.mrb[0].mxu0
    %v751 = vadd.f32 0.0, %v750
    %v752 = vpop.f32.mrb[0].mxu0
    %753 = vmatprep.mubr.bf16.mxu0 0
    %754 = vmatmul.mubr.bf16.gmra.mrb[0].mxu0 %v710
    %v755 = vpop.f32.mrb[0].mxu0
    %v756 = vadd.f32 0.0, %v755
    %v757 = vpop.f32.mrb[0].mxu0
    %v758 = vpop.f32.mrb[0].mxu0
    %v759 = vadd.f32 0.0, %v758
    %v760 = vpop.f32.mrb[0].mxu0
    %761 = vmatprep.mubr.bf16.mxu0 0
    %762 = vmatmul.mubr.bf16.gmra.mrb[0].mxu0 %v711
    %v763 = vpop.f32.mrb[0].mxu0
    %v764 = vadd.f32 0.0, %v763
    %v765 = vpop.f32.mrb[0].mxu0
    %v766 = vpop.f32.mrb[0].mxu0
    %v767 = vadd.f32 0.0, %v766
    %v768 = vpop.f32.mrb[0].mxu0
    %769 = vmatprep.mubr.bf16.mxu0 0
    %770 = vmatmul.mubr.bf16.gmra.mrb[0].mxu0 %v712
    %v771 = vpop.f32.mrb[0].mxu0
    %v772 = vadd.f32 0.0, %v771
    %v773 = vpop.f32.mrb[0].mxu0
    %v774 = vpop.f32.mrb[0].mxu0
    %v775 = vadd.f32 0.0, %v774
    %v776 = vpop.f32.mrb[0].mxu0
    %777 = vdwg.mxu0
    %vm778 = vcmask 64512
    %v779 = vsel %vm778, %v748, -inf
    %780 = vmax.xlane.f32.xlu0 %v779
    %v781 = vpop.xlane.xlu0 %780
    %v782 = vsel %vm778, %v751, -inf
    %783 = vmax.xlane.f32.xlu0 %v782
    %v784 = vpop.xlane.xlu0 %783
    %v785 = vsel %vm778, %v756, -inf
    %786 = vmax.xlane.f32.xlu0 %v785
    %v787 = vpop.xlane.xlu0 %786
    %v788 = vsel %vm778, %v759, -inf
    %789 = vmax.xlane.f32.xlu0 %v788
    %v790 = vpop.xlane.xlu0 %789
    %v791 = vsel %vm778, %v764, -inf
    %792 = vmax.xlane.f32.xlu0 %v791
    %v793 = vpop.xlane.xlu0 %792
    %v794 = vsel %vm778, %v767, -inf
    %795 = vmax.xlane.f32.xlu0 %v794
    %v796 = vpop.xlane.xlu0 %795
    %v797 = vsel %vm778, %v772, -inf
    %798 = vmax.xlane.f32.xlu0 %v797
    %v799 = vpop.xlane.xlu0 %798
    %v800 = vsel %vm778, %v775, -inf
    %801 = vmax.xlane.f32.xlu0 %v800
    %v802 = vpop.xlane.xlu0 %801
    %v803 = vsub.f32 %v748, %v781
    %v804 = vsub.f32 %v751, %v784
    %v805 = vsub.f32 %v756, %v787
    %v806 = vsub.f32 %v759, %v790
    %v807 = vsub.f32 %v764, %v793
    %v808 = vsub.f32 %v767, %v796
    %v809 = vsub.f32 %v772, %v799
    %v810 = vsub.f32 %v775, %v802
    %v811 = vmul.f32 %v803, 1.442695
    %v812 = vpow.pop %v811
    %v813 = vmul.f32 %v804, 1.442695
    %v814 = vpow.pop %v813
    %v815 = vmul.f32 %v805, 1.442695
    %v816 = vpow.pop %v815
    %v817 = vmul.f32 %v806, 1.442695
    %v818 = vpow.pop %v817
    %v819 = vmul.f32 %v807, 1.442695
    %v820 = vpow.pop %v819
    %v821 = vmul.f32 %v808, 1.442695
    %v822 = vpow.pop %v821
    %v823 = vmul.f32 %v809, 1.442695
    %v824 = vpow.pop %v823
    %v825 = vmul.f32 %v810, 1.442695
    %v826 = vpow.pop %v825
    %v827 = vsel %vm778, %v812, 0.0
    %828 = vadd.xlane.f32.xlu0 %v827
    %v829 = vpop.xlane.xlu0 %828
    %v830 = vsel %vm778, %v814, 0.0
    %831 = vadd.xlane.f32.xlu0 %v830
    %v832 = vpop.xlane.xlu0 %831
    %v833 = vsel %vm778, %v816, 0.0
    %834 = vadd.xlane.f32.xlu0 %v833
    %v835 = vpop.xlane.xlu0 %834
    %v836 = vsel %vm778, %v818, 0.0
    %837 = vadd.xlane.f32.xlu0 %v836
    %v838 = vpop.xlane.xlu0 %837
    %v839 = vsel %vm778, %v820, 0.0
    %840 = vadd.xlane.f32.xlu0 %v839
    %v841 = vpop.xlane.xlu0 %840
    %v842 = vsel %vm778, %v822, 0.0
    %843 = vadd.xlane.f32.xlu0 %v842
    %v844 = vpop.xlane.xlu0 %843
    %v845 = vsel %vm778, %v824, 0.0
    %846 = vadd.xlane.f32.xlu0 %v845
    %v847 = vpop.xlane.xlu0 %846
    %v848 = vsel %vm778, %v826, 0.0
    %849 = vadd.xlane.f32.xlu0 %v848
    %v850 = vpop.xlane.xlu0 %849
    %v851 = vrcp.pop %v829
    %v852 = vrcp.pop %v832
    %v853 = vrcp.pop %v835
    %v854 = vrcp.pop %v838
    %v855 = vrcp.pop %v841
    %v856 = vrcp.pop %v844
    %v857 = vrcp.pop %v847
    %v858 = vrcp.pop %v850
    %v859 = vmul.f32 %v812, %v851
    %v860 = vmul.f32 %v814, %v852
    %v861 = vmul.f32 %v816, %v853
    %v862 = vmul.f32 %v818, %v854
    %v863 = vmul.f32 %v820, %v855
    %v864 = vmul.f32 %v822, %v856
    %v865 = vmul.f32 %v824, %v857
    %v866 = vmul.f32 %v826, %v858
    %v867 = vpack.c.bf16 %v860, %v859
    %v868 = vpack.c.bf16 %v862, %v861
    %v869 = vpack.c.bf16 %v864, %v863
    %v870 = vpack.c.bf16 %v866, %v865
    %v872 = vsel %vm778, %v867, 0
    %v875 = vsel %vm778, %v868, 0
    %v878 = vsel %vm778, %v869, 0
    %v881 = vsel %vm778, %v870, 0
    %vm883 = vcmask 1043456
    %v885 = vsel %vm883, %v708, 0
    %887 = vmatprep.subr.bf16.mxu0 0
    %888 = vmatpush1.bf16.msra.mxu0 %v885
    %889 = vmatprep.subr.bf16.mxu0 0
    %890 = vmatpush1.bf16.msra.mxu0 0
    %891 = vmatprep.subr.bf16.mxu0 0
    %892 = vmatpush1.bf16.msra.mxu0 0
    %893 = vmatprep.subr.bf16.mxu0 0
    %894 = vmatpush1.bf16.msra.mxu0 0
    %895 = vmatprep.subr.bf16.mxu0 0
    %896 = vmatpush1.bf16.msra.mxu0 0
    %897 = vmatprep.subr.bf16.mxu0 0
    %898 = vmatpush1.bf16.msra.mxu0 0
    %899 = vmatprep.subr.bf16.mxu0 0
    %900 = vmatpush1.bf16.msra.mxu0 0
    %901 = vmatprep.subr.bf16.mxu0 0
    %902 = vmatpush1.bf16.msra.mxu0 0
    %903 = vmatprep.subr.bf16.mxu0 0
    %904 = vmatpush1.bf16.msra.mxu0 0
    %905 = vmatprep.subr.bf16.mxu0 0
    %906 = vmatpush1.bf16.msra.mxu0 0
    %907 = vmatprep.subr.bf16.mxu0 0
    %908 = vmatpush1.bf16.msra.mxu0 0
    %909 = vmatprep.subr.bf16.mxu0 0
    %910 = vmatpush1.bf16.msra.mxu0 0
    %911 = vmatprep.subr.bf16.mxu0 0
    %912 = vmatpush1.bf16.msra.mxu0 0
    %913 = vmatprep.subr.bf16.mxu0 0
    %914 = vmatpush1.bf16.msra.mxu0 0
    %915 = vmatprep.subr.bf16.mxu0 0
    %916 = vmatpush1.bf16.msra.mxu0 0
    %917 = vmatprep.subr.bf16.mxu0 0
    %918 = vmatpush1.bf16.msra.mxu0 0
    %919 = vmatprep.mubr.bf16.mxu0 0
    %920 = vmatmul.mubr.bf16.gmra.mrb[0].mxu0 %v872
    %v921 = vpop.f32.mrb[0].mxu0
    %v922 = vadd.f32 0.0, %v921
    %v923 = vpop.f32.mrb[0].mxu0
    %v924 = vpop.f32.mrb[0].mxu0
    %v925 = vadd.f32 0.0, %v924
    %v926 = vpop.f32.mrb[0].mxu0
    %927 = vmatprep.mubr.bf16.mxu0 0
    %928 = vmatmul.mubr.bf16.gmra.mrb[0].mxu0 %v875
    %v929 = vpop.f32.mrb[0].mxu0
    %v930 = vadd.f32 0.0, %v929
    %v931 = vpop.f32.mrb[0].mxu0
    %v932 = vpop.f32.mrb[0].mxu0
    %v933 = vadd.f32 0.0, %v932
    %v934 = vpop.f32.mrb[0].mxu0
    %935 = vmatprep.mubr.bf16.mxu0 0
    %936 = vmatmul.mubr.bf16.gmra.mrb[0].mxu0 %v878
    %v937 = vpop.f32.mrb[0].mxu0
    %v938 = vadd.f32 0.0, %v937
    %v939 = vpop.f32.mrb[0].mxu0
    %v940 = vpop.f32.mrb[0].mxu0
    %v941 = vadd.f32 0.0, %v940
    %v942 = vpop.f32.mrb[0].mxu0
    %943 = vmatprep.mubr.bf16.mxu0 0
    %944 = vmatmul.mubr.bf16.gmra.mrb[0].mxu0 %v881
    %v945 = vpop.f32.mrb[0].mxu0
    %v946 = vadd.f32 0.0, %v945
    %v947 = vpop.f32.mrb[0].mxu0
    %v948 = vpop.f32.mrb[0].mxu0
    %v949 = vadd.f32 0.0, %v948
    %v950 = vpop.f32.mrb[0].mxu0
    %951 = vdwg.mxu0
    %v952 = vld [vmem:[#allocation2 + $0xd0] sm:$0xf]
    %v953 = vld [vmem:[#allocation2 + $0xd4] sm:$0xf]
    %v954 = vld [vmem:[#allocation2 + $0xd8] sm:$0xf]
    %v955 = vld [vmem:[#allocation2 + $0xdc] sm:$0xf]
    %v956 = vld [vmem:[#allocation2 + $0xe0] sm:$0xf]
    %v957 = vld [vmem:[#allocation2 + $0xe4] sm:$0xf]
    %v958 = vld [vmem:[#allocation2 + $0xe8] sm:$0xf]
    %v959 = vld [vmem:[#allocation2 + $0xec] sm:$0xf]
    %v960 = vld [vmem:[#allocation2 + $0xf0] sm:$0xf]
    %v961 = vld [vmem:[#allocation2 + $0xf4] sm:$0xf]
    %v962 = vld [vmem:[#allocation2 + $0xf8] sm:$0xf]
    %v963 = vld [vmem:[#allocation2 + $0xfc] sm:$0xf]
    %v964 = vld [vmem:[#allocation2 + $0x100] sm:$0xf]
    %v965 = vld [vmem:[#allocation2 + $0x104] sm:$0xf]
    %v966 = vld [vmem:[#allocation2 + $0x108] sm:$0xf]
    %v967 = vld [vmem:[#allocation2 + $0x10c] sm:$0xf]
    %v968 = vpack.c.bf16 %v925, %v922
    %v969 = vpack.c.bf16 %v933, %v930
    %v970 = vpack.c.bf16 %v941, %v938
    %v971 = vpack.c.bf16 %v949, %v946
    %v988 = vunpack.c.l.b16 %v952
    %v989 = vunpack.c.l.b16 %v953
    %v990 = vunpack.c.l.b16 %v954
    %v991 = vunpack.c.l.b16 %v955
    %v992 = vunpack.c.l.b16 %v956
    %v993 = vunpack.c.l.b16 %v957
    %v994 = vunpack.c.l.b16 %v958
    %v995 = vunpack.c.l.b16 %v959
    %v996 = vunpack.c.l.b16 %v960
    %v997 = vunpack.c.l.b16 %v961
    %v998 = vunpack.c.l.b16 %v962
    %v999 = vunpack.c.l.b16 %v963
    %v1000 = vunpack.c.l.b16 %v964
    %v1001 = vunpack.c.l.b16 %v965
    %v1002 = vunpack.c.l.b16 %v966
    %v1003 = vunpack.c.l.b16 %v967
    %v1004 = vpack.c.b16 %v989, %v988
    %v1005 = vpack.c.b16 %v991, %v990
    %v1006 = vpack.c.b16 %v993, %v992
    %v1007 = vpack.c.b16 %v995, %v994
    %v1008 = vpack.c.b16 %v997, %v996
    %v1009 = vpack.c.b16 %v999, %v998
    %v1010 = vpack.c.b16 %v1001, %v1000
    %v1011 = vpack.c.b16 %v1003, %v1002
    %1020 = vmatprep.subr.bf16.mxu0 0
    %1021 = vmatpush1.bf16.msra.mxu0 %v1004
    %1022 = vmatprep.subr.bf16.mxu0 0
    %1023 = vmatpush1.bf16.msra.mxu0 %v1005
    %1024 = vmatprep.subr.bf16.mxu0 0
    %1025 = vmatpush1.bf16.msra.mxu0 %v1006
    %1026 = vmatprep.subr.bf16.mxu0 0
    %1027 = vmatpush1.bf16.msra.mxu0 %v1007
    %1028 = vmatprep.subr.bf16.mxu0 0
    %1029 = vmatpush1.bf16.msra.mxu0 %v1008
    %1030 = vmatprep.subr.bf16.mxu0 0
    %1031 = vmatpush1.bf16.msra.mxu0 %v1009
    %1032 = vmatprep.subr.bf16.mxu0 0
    %1033 = vmatpush1.bf16.msra.mxu0 %v1010
    %1034 = vmatprep.subr.bf16.mxu0 0
    %1035 = vmatpush1.bf16.msra.mxu0 %v1011
    %1036 = vmatprep.subr.bf16.mxu0 0
    %1037 = vmatpush1.bf16.msra.mxu0 0
    %1038 = vmatprep.subr.bf16.mxu0 0
    %1039 = vmatpush1.bf16.msra.mxu0 0
    %1040 = vmatprep.subr.bf16.mxu0 0
    %1041 = vmatpush1.bf16.msra.mxu0 0
    %1042 = vmatprep.subr.bf16.mxu0 0
    %1043 = vmatpush1.bf16.msra.mxu0 0
    %1044 = vmatprep.subr.bf16.mxu0 0
    %1045 = vmatpush1.bf16.msra.mxu0 0
    %1046 = vmatprep.subr.bf16.mxu0 0
    %1047 = vmatpush1.bf16.msra.mxu0 0
    %1048 = vmatprep.subr.bf16.mxu0 0
    %1049 = vmatpush1.bf16.msra.mxu0 0
    %1050 = vmatprep.subr.bf16.mxu0 0
    %1051 = vmatpush1.bf16.msra.mxu0 0
    %1052 = vmatprep.mubr.bf16.mxu0 0
    %1053 = vmatmul.mubr.bf16.gmra.mrb[0].mxu0 %v968
    %v1054 = vpop.f32.mrb[0].mxu0
    %v1055 = vadd.f32 0.0, %v1054
    %v1056 = vpop.f32.mrb[0].mxu0
    %v1057 = vpop.f32.mrb[0].mxu0
    %v1058 = vadd.f32 0.0, %v1057
    %v1059 = vpop.f32.mrb[0].mxu0
    %1060 = vmatprep.mubr.bf16.mxu0 0
    %1061 = vmatmul.mubr.bf16.gmra.mrb[0].mxu0 %v969
    %v1062 = vpop.f32.mrb[0].mxu0
    %v1063 = vadd.f32 0.0, %v1062
    %v1064 = vpop.f32.mrb[0].mxu0
    %v1065 = vpop.f32.mrb[0].mxu0
    %v1066 = vadd.f32 0.0, %v1065
    %v1067 = vpop.f32.mrb[0].mxu0
    %1068 = vmatprep.mubr.bf16.mxu0 0
    %1069 = vmatmul.mubr.bf16.gmra.mrb[0].mxu0 %v970
    %v1070 = vpop.f32.mrb[0].mxu0
    %v1071 = vadd.f32 0.0, %v1070
    %v1072 = vpop.f32.mrb[0].mxu0
    %v1073 = vpop.f32.mrb[0].mxu0
    %v1074 = vadd.f32 0.0, %v1073
    %v1075 = vpop.f32.mrb[0].mxu0
    %1076 = vmatprep.mubr.bf16.mxu0 0
    %1077 = vmatmul.mubr.bf16.gmra.mrb[0].mxu0 %v971
    %v1078 = vpop.f32.mrb[0].mxu0
    %v1079 = vadd.f32 0.0, %v1078
    %v1080 = vpop.f32.mrb[0].mxu0
    %v1081 = vpop.f32.mrb[0].mxu0
    %v1082 = vadd.f32 0.0, %v1081
    %v1083 = vpop.f32.mrb[0].mxu0
    %1084 = vdwg.mxu0
    %v1085 = vadd.f32 %v566, %v1055
    %v1086 = vadd.f32 %v567, %v1058
    %v1087 = vadd.f32 %v568, %v1063
    %v1088 = vadd.f32 %v569, %v1066
    %v1089 = vadd.f32 %v570, %v1071
    %v1090 = vadd.f32 %v571, %v1074
    %v1091 = vadd.f32 %v572, %v1079
    %v1092 = vadd.f32 %v573, %v1082
    %v1093 = vld [vmem:[#allocation2 + $0x110] sm:$0xf]
    %v1094 = vld [vmem:[#allocation2 + $0x114] sm:$0xf]
    %v1095 = vld [vmem:[#allocation2 + $0x118] sm:$0xf]
    %v1096 = vld [vmem:[#allocation2 + $0x11c] sm:$0xf]
    %v1097 = vld [vmem:[#allocation2 + $0x120] sm:$0xf]
    %v1098 = vld [vmem:[#allocation2 + $0x124] sm:$0xf]
    %v1099 = vld [vmem:[#allocation2 + $0x128] sm:$0xf]
    %v1100 = vld [vmem:[#allocation2 + $0x12c] sm:$0xf]
    %v1101 = vld [vmem:[#allocation2 + $0x130] sm:$0xf]
    %v1102 = vld [vmem:[#allocation2 + $0x134] sm:$0xf]
    %v1103 = vld [vmem:[#allocation2 + $0x138] sm:$0xf]
    %v1104 = vld [vmem:[#allocation2 + $0x13c] sm:$0xf]
    %v1105 = vld [vmem:[#allocation2 + $0x140] sm:$0xf]
    %v1106 = vld [vmem:[#allocation2 + $0x144] sm:$0xf]
    %v1107 = vld [vmem:[#allocation2 + $0x148] sm:$0xf]
    %v1108 = vld [vmem:[#allocation2 + $0x14c] sm:$0xf]
    %v1109 = vpack.c.bf16 %v1086, %v1085
    %v1110 = vpack.c.bf16 %v1088, %v1087
    %v1111 = vpack.c.bf16 %v1090, %v1089
    %v1112 = vpack.c.bf16 %v1092, %v1091
    %v1113 = vld [vmem:[#allocation2 + $0x160] sm:$0x1]
    %v1114 = vunpack.c.l.bf16 %v1113
    %v1115 = vlaneseq
    %v1116 = vshrl.u32 %v1115, 7
    %v1117 = vsub.s32 0, %v1116
    %v1118 = vrot.slane %v1114, %v1117
    %v1135 = vunpack.c.l.b16 %v1093
    %v1136 = vunpack.c.l.b16 %v1094
    %v1137 = vunpack.c.l.b16 %v1095
    %v1138 = vunpack.c.l.b16 %v1096
    %v1139 = vunpack.c.l.b16 %v1097
    %v1140 = vunpack.c.l.b16 %v1098
    %v1141 = vunpack.c.l.b16 %v1099
    %v1142 = vunpack.c.l.b16 %v1100
    %v1143 = vunpack.c.l.b16 %v1101
    %v1144 = vunpack.c.l.b16 %v1102
    %v1145 = vunpack.c.l.b16 %v1103
    %v1146 = vunpack.c.l.b16 %v1104
    %v1147 = vunpack.c.l.b16 %v1105
    %v1148 = vunpack.c.l.b16 %v1106
    %v1149 = vunpack.c.l.b16 %v1107
    %v1150 = vunpack.c.l.b16 %v1108
    %v1151 = vpack.c.b16 %v1136, %v1135
    %v1152 = vpack.c.b16 %v1138, %v1137
    %v1153 = vpack.c.b16 %v1140, %v1139
    %v1154 = vpack.c.b16 %v1142, %v1141
    %v1155 = vpack.c.b16 %v1144, %v1143
    %v1156 = vpack.c.b16 %v1146, %v1145
    %v1157 = vpack.c.b16 %v1148, %v1147
    %v1158 = vpack.c.b16 %v1150, %v1149
    %1167 = vmatprep.subr.bf16.mxu0 0
    %1168 = vmatpush1.bf16.msra.mxu0 %v1151
    %1169 = vmatprep.subr.bf16.mxu0 0
    %1170 = vmatpush1.bf16.msra.mxu0 %v1152
    %1171 = vmatprep.subr.bf16.mxu0 0
    %1172 = vmatpush1.bf16.msra.mxu0 %v1153
    %1173 = vmatprep.subr.bf16.mxu0 0
    %1174 = vmatpush1.bf16.msra.mxu0 %v1154
    %1175 = vmatprep.subr.bf16.mxu0 0
    %1176 = vmatpush1.bf16.msra.mxu0 %v1155
    %1177 = vmatprep.subr.bf16.mxu0 0
    %1178 = vmatpush1.bf16.msra.mxu0 %v1156
    %1179 = vmatprep.subr.bf16.mxu0 0
    %1180 = vmatpush1.bf16.msra.mxu0 %v1157
    %1181 = vmatprep.subr.bf16.mxu0 0
    %1182 = vmatpush1.bf16.msra.mxu0 %v1158
    %1183 = vmatprep.subr.bf16.mxu0 0
    %1184 = vmatpush1.bf16.msra.mxu0 0
    %1185 = vmatprep.subr.bf16.mxu0 0
    %1186 = vmatpush1.bf16.msra.mxu0 0
    %1187 = vmatprep.subr.bf16.mxu0 0
    %1188 = vmatpush1.bf16.msra.mxu0 0
    %1189 = vmatprep.subr.bf16.mxu0 0
    %1190 = vmatpush1.bf16.msra.mxu0 0
    %1191 = vmatprep.subr.bf16.mxu0 0
    %1192 = vmatpush1.bf16.msra.mxu0 0
    %1193 = vmatprep.subr.bf16.mxu0 0
    %1194 = vmatpush1.bf16.msra.mxu0 0
    %1195 = vmatprep.subr.bf16.mxu0 0
    %1196 = vmatpush1.bf16.msra.mxu0 0
    %1197 = vmatprep.subr.bf16.mxu0 0
    %1198 = vmatpush1.bf16.msra.mxu0 0
    %1199 = vmatprep.mubr.bf16.mxu0 0
    %1200 = vmatmul.mubr.bf16.gmra.mrb[0].mxu0 %v1109
    %v1201 = vpop.f32.mrb[0].mxu0
    %v1202 = vadd.f32 %v1118, %v1201
    %v1203 = vpop.f32.mrb[0].mxu0
    %v1204 = vpop.f32.mrb[0].mxu0
    %v1205 = vadd.f32 %v1118, %v1204
    %v1206 = vpop.f32.mrb[0].mxu0
    %1207 = vmatprep.mubr.bf16.mxu0 0
    %1208 = vmatmul.mubr.bf16.gmra.mrb[0].mxu0 %v1110
    %v1209 = vpop.f32.mrb[0].mxu0
    %v1210 = vadd.f32 %v1118, %v1209
    %v1211 = vpop.f32.mrb[0].mxu0
    %v1212 = vpop.f32.mrb[0].mxu0
    %v1213 = vadd.f32 %v1118, %v1212
    %v1214 = vpop.f32.mrb[0].mxu0
    %1215 = vmatprep.mubr.bf16.mxu0 0
    %1216 = vmatmul.mubr.bf16.gmra.mrb[0].mxu0 %v1111
    %v1217 = vpop.f32.mrb[0].mxu0
    %v1218 = vadd.f32 %v1118, %v1217
    %v1219 = vpop.f32.mrb[0].mxu0
    %v1220 = vpop.f32.mrb[0].mxu0
    %v1221 = vadd.f32 %v1118, %v1220
    %v1222 = vpop.f32.mrb[0].mxu0
    %1223 = vmatprep.mubr.bf16.mxu0 0
    %1224 = vmatmul.mubr.bf16.gmra.mrb[0].mxu0 %v1112
    %v1225 = vpop.f32.mrb[0].mxu0
    %v1226 = vadd.f32 %v1118, %v1225
    %v1227 = vpop.f32.mrb[0].mxu0
    %v1228 = vpop.f32.mrb[0].mxu0
    %v1229 = vadd.f32 %v1118, %v1228
    %v1230 = vpop.f32.mrb[0].mxu0
    %1231 = vdwg.mxu0
    %1232 = vst [vmem:[#allocation5] sm:$0xff] %v1202
    %1233 = vst [vmem:[#allocation5 + $0x8] sm:$0xff] %v1205
    %1234 = vst [vmem:[#allocation5 + $0x10] sm:$0xff] %v1210
    %1235 = vst [vmem:[#allocation5 + $0x18] sm:$0xff] %v1213
    %1236 = vst [vmem:[#allocation5 + $0x20] sm:$0xff] %v1218
    %1237 = vst [vmem:[#allocation5 + $0x28] sm:$0xff] %v1221
    %1238 = vst [vmem:[#allocation5 + $0x30] sm:$0xff] %v1226
    %1239 = vst [vmem:[#allocation5 + $0x38] sm:$0xff] %v1229
    // Predicated region
    $region22: #{tpu_custom_call.1} parent=1 // pred_check
      _
    $region23: #{tpu_custom_call.1} parent=1 // pred_check_branch
      %1241 = sbr.rel (0) target = $region25
    $region24: #{tpu_custom_call.1} parent=1 // pred_region
      %s1243 = ssub.s32 1024, 1024
      %1244 = vsyncadd [#allocation4], %s1243
      %s1245 = sshll.u32 [#allocation5], 4
      %s1246 = int_to_ptr.vmem [resolvable:$true] %s1245
      %1251 = dma.vmem_to_hbm [thread:$0]  %s1246, 1024, %s4, [#allocation4], 128, 128, 8
    $region25: #{tpu_custom_call.1} parent=1 // pred_fallthru
      _
    // Predicated region
    $region26: #{tpu_custom_call.1} parent=1 // pred_check
      _
    $region27: #{tpu_custom_call.1} parent=1 // pred_check_branch
      %1253 = sbr.rel (0) target = $region29
    $region28: #{tpu_custom_call.1} parent=1 // pred_region
      %1254 = dma.done [#allocation4], 1024
    $region29: #{tpu_custom_call.1} parent=1 // pred_fallthru
      _
    %1255 = vsyncpa [#allocation3], 1
    %1256 = vsyncpa [#allocation4], 1

</llo_original>
